<compile_context>
chip_gen: v7x
topology: tpu7x:2x2x1
jax: 0.10.0
libtpu: 0.0.40
codegen_flags: <defaults>
</compile_context>

<pallas_src>
import math

import jax
import jax.numpy as jnp
from jax.experimental import pallas as pl
from jax.experimental.pallas import tpu as pltpu


_LANES = 128
_SUBLANES = 8
# Double-buffered per-tile working-set target.  Conservative enough for v7x
# (64 MiB VMEM per TensorCore) while still putting ~2K rows per tile for the
# typical KGCN K=8 / dim=32 case (the 85%+ of-roofline regime).
_VMEM_TILE_BUDGET = 20 * 1024 * 1024
# Raise the scoped VMEM limit above the 16 MiB (v5e) / 32 MiB (v6e/v7x)
# defaults, but stay below v7x's 64 MiB physical capacity.
_VMEM_LIMIT_BYTES = 48 * 1024 * 1024


def _make_aggregator_kernel(fold, n_neighbors, dim):
    """Kernel over lane-dense folded 2-D tiles.

    self_ref : (TM, fold * dim)
    neigh_ref: (TM, fold * n_neighbors * dim)   lanes ordered (f, k, d)
    o_ref    : (TM, fold * dim)                 lanes ordered (f, d)
    """
    inv_k = 1.0 / float(n_neighbors)
    kd = n_neighbors * dim

    def kernel(self_ref, neigh_ref, o_ref):
        self_v = self_ref[...].astype(jnp.float32)
        neigh_v = neigh_ref[...].astype(jnp.float32)

        # Mean over the K neighbors: for each folded entity f, sum its K
        # contiguous D-wide lane chunks.  Static slices + adds only (no
        # reshapes), fully unrolled at trace time; compute is hidden under DMA.
        chunks = []
        for f in range(fold):
            base = f * kd
            acc = neigh_v[:, base:base + dim]
            for k in range(1, n_neighbors):
                lo = base + k * dim
                acc = acc + neigh_v[:, lo:lo + dim]
            chunks.append(acc)
        neigh_sum = chunks[0] if fold == 1 else jnp.concatenate(chunks, axis=-1)

        agg = self_v + neigh_sum * inv_k
        o_ref[...] = jnp.tanh(agg).astype(o_ref.dtype)

    return kernel


def aggregator_forward(self_vectors, neighbor_vectors, *, block_rows=None):
    """self_vectors: [M, D], neighbor_vectors: [M, K, D] -> [M, D].

    out = tanh(self + mean_K(neighbors));   dropout = identity (eval mode).
    `block_rows` optionally overrides the folded-row tile size (testing).
    """
    M, D = self_vectors.shape
    Mn, K, Dn = neighbor_vectors.shape
    assert Mn == M and Dn == D

    # ---- Lane-density fold (free row-major reshapes, no transposes). ----
    if D % _LANES == 0:
        fold = 1
    else:
        fold = _LANES // math.gcd(D, _LANES)
        if M % fold != 0:
            # TODO(synk): could pad M up to a multiple of `fold` instead of
            # falling back to the (lane-padded) unfolded layout.
            fold = 1

    mf = M // fold
    self_lanes = fold * D
    neigh_lanes = fold * K * D

    self_f = self_vectors.reshape(mf, self_lanes)          # free view
    neigh_f = neighbor_vectors.reshape(mf, neigh_lanes)    # free view

    # ---- Row-tile sizing against the double-buffered VMEM budget. ----
    s_bytes = self_lanes * self_vectors.dtype.itemsize
    n_bytes = neigh_lanes * neighbor_vectors.dtype.itemsize
    row_bytes = n_bytes + 2 * s_bytes                      # neigh + self + out
    tm = _VMEM_TILE_BUDGET // (2 * row_bytes)              # x2: double buffers
    tm = max(_SUBLANES, min(int(tm), 2048))
    tm = (tm // _SUBLANES) * _SUBLANES
    if block_rows is not None:
        tm = int(block_rows)
    if tm >= mf:
        tm = mf                                            # full-extent block

    grid = (pl.cdiv(mf, tm),)
    kernel = _make_aggregator_kernel(fold, K, D)

    out_f = pl.pallas_call(
        kernel,
        out_shape=jax.ShapeDtypeStruct((mf, self_lanes), self_vectors.dtype),
        grid_spec=pltpu.PrefetchScalarGridSpec(
            num_scalar_prefetch=0,
            grid=grid,
            in_specs=[
                pl.BlockSpec((tm, self_lanes), lambda i: (i, 0)),
                pl.BlockSpec((tm, neigh_lanes), lambda i: (i, 0)),
            ],
            out_specs=pl.BlockSpec((tm, self_lanes), lambda i: (i, 0)),
        ),
        compiler_params=pltpu.CompilerParams(
            dimension_semantics=("parallel",),        # megacore on v7x
            vmem_limit_bytes=_VMEM_LIMIT_BYTES,
        ),
    )(self_f, neigh_f)

    return out_f.reshape(M, D)


def aggregator_reference(self_vectors, neighbor_vectors):
    return jnp.tanh(self_vectors + jnp.mean(neighbor_vectors, axis=1))


if __name__ == "__main__":
    # Small, deterministic example consistent with the module's __init__.
    batch_size = 2
    n_entities = 8       # entities per batch element
    dim = 32             # feature dim
    n_neighbors = 8      # K
    M = batch_size * n_entities

    key = jax.random.PRNGKey(0)
    k1, k2, k3, k4 = jax.random.split(key, 4)
    self_vecs = jax.random.normal(k1, (M, dim), dtype=jnp.float32)
    neigh_vecs = jax.random.normal(k2, (M, n_neighbors, dim), dtype=jnp.float32)

    out = jax.block_until_ready(aggregator_forward(self_vecs, neigh_vecs))
    ref = aggregator_reference(self_vecs, neigh_vecs)
    assert out.shape == (M, dim)
    assert jnp.allclose(out, ref, atol=1e-5, rtol=1e-5)

    # Slightly larger check that exercises the multi-tile, pipelined path
    # (folded rows = 1024, tile = 256 -> grid of 4).
    M2 = 64 * 64
    self2 = jax.random.normal(k3, (M2, dim), dtype=jnp.float32)
    neigh2 = jax.random.normal(k4, (M2, n_neighbors, dim), dtype=jnp.float32)
    out2 = jax.block_until_ready(
        aggregator_forward(self2, neigh2, block_rows=256))
    ref2 = aggregator_reference(self2, neigh2)
    assert jnp.allclose(out2, ref2, atol=1e-5, rtol=1e-5)

    print("KERNEL_OK")
</pallas_src>

<mosaic_0001>
module attributes {stable_mosaic.version = 11 : i64} {
  func.func @kernel(%arg0: i32, %arg1: memref<4x128xf32, #tpu.memory_space<vmem>>, %arg2: memref<4x1024xf32, #tpu.memory_space<vmem>>, %arg3: memref<4x128xf32, #tpu.memory_space<vmem>>) attributes {dimension_semantics = [#tpu.dimension_semantics<parallel>], iteration_bounds = array<i64: 1>, scalar_prefetch = 0 : i64, scratch_operands = 0 : i64, tpu.core_type = #tpu.core_type<tc>, window_params = [{transform_indices = @transform_0, window_bounds = array<i64: 4, 128>}, {transform_indices = @transform_1, window_bounds = array<i64: 4, 1024>}, {transform_indices = @transform_2, window_bounds = array<i64: 4, 128>}]} {
    %c0 = arith.constant 0 : index
    %c0_0 = arith.constant 0 : index
    %0 = vector.load %arg1[%c0, %c0_0] : memref<4x128xf32, #tpu.memory_space<vmem>>, vector<4x128xf32>
    %c0_1 = arith.constant 0 : index
    %c0_2 = arith.constant 0 : index
    %1 = vector.load %arg2[%c0_1, %c0_2] : memref<4x1024xf32, #tpu.memory_space<vmem>>, vector<4x1024xf32>
    %2 = vector.extract_strided_slice %1 {offsets = [0, 0], sizes = [4, 32], strides = [1, 1]} : vector<4x1024xf32> to vector<4x32xf32>
    %3 = vector.extract_strided_slice %1 {offsets = [0, 32], sizes = [4, 32], strides = [1, 1]} : vector<4x1024xf32> to vector<4x32xf32>
    %4 = arith.addf %2, %3 : vector<4x32xf32>
    %5 = vector.extract_strided_slice %1 {offsets = [0, 64], sizes = [4, 32], strides = [1, 1]} : vector<4x1024xf32> to vector<4x32xf32>
    %6 = arith.addf %4, %5 : vector<4x32xf32>
    %7 = vector.extract_strided_slice %1 {offsets = [0, 96], sizes = [4, 32], strides = [1, 1]} : vector<4x1024xf32> to vector<4x32xf32>
    %8 = arith.addf %6, %7 : vector<4x32xf32>
    %9 = vector.extract_strided_slice %1 {offsets = [0, 128], sizes = [4, 32], strides = [1, 1]} : vector<4x1024xf32> to vector<4x32xf32>
    %10 = arith.addf %8, %9 : vector<4x32xf32>
    %11 = vector.extract_strided_slice %1 {offsets = [0, 160], sizes = [4, 32], strides = [1, 1]} : vector<4x1024xf32> to vector<4x32xf32>
    %12 = arith.addf %10, %11 : vector<4x32xf32>
    %13 = vector.extract_strided_slice %1 {offsets = [0, 192], sizes = [4, 32], strides = [1, 1]} : vector<4x1024xf32> to vector<4x32xf32>
    %14 = arith.addf %12, %13 : vector<4x32xf32>
    %15 = vector.extract_strided_slice %1 {offsets = [0, 224], sizes = [4, 32], strides = [1, 1]} : vector<4x1024xf32> to vector<4x32xf32>
    %16 = arith.addf %14, %15 : vector<4x32xf32>
    %17 = vector.extract_strided_slice %1 {offsets = [0, 256], sizes = [4, 32], strides = [1, 1]} : vector<4x1024xf32> to vector<4x32xf32>
    %18 = vector.extract_strided_slice %1 {offsets = [0, 288], sizes = [4, 32], strides = [1, 1]} : vector<4x1024xf32> to vector<4x32xf32>
    %19 = arith.addf %17, %18 : vector<4x32xf32>
    %20 = vector.extract_strided_slice %1 {offsets = [0, 320], sizes = [4, 32], strides = [1, 1]} : vector<4x1024xf32> to vector<4x32xf32>
    %21 = arith.addf %19, %20 : vector<4x32xf32>
    %22 = vector.extract_strided_slice %1 {offsets = [0, 352], sizes = [4, 32], strides = [1, 1]} : vector<4x1024xf32> to vector<4x32xf32>
    %23 = arith.addf %21, %22 : vector<4x32xf32>
    %24 = vector.extract_strided_slice %1 {offsets = [0, 384], sizes = [4, 32], strides = [1, 1]} : vector<4x1024xf32> to vector<4x32xf32>
    %25 = arith.addf %23, %24 : vector<4x32xf32>
    %26 = vector.extract_strided_slice %1 {offsets = [0, 416], sizes = [4, 32], strides = [1, 1]} : vector<4x1024xf32> to vector<4x32xf32>
    %27 = arith.addf %25, %26 : vector<4x32xf32>
    %28 = vector.extract_strided_slice %1 {offsets = [0, 448], sizes = [4, 32], strides = [1, 1]} : vector<4x1024xf32> to vector<4x32xf32>
    %29 = arith.addf %27, %28 : vector<4x32xf32>
    %30 = vector.extract_strided_slice %1 {offsets = [0, 480], sizes = [4, 32], strides = [1, 1]} : vector<4x1024xf32> to vector<4x32xf32>
    %31 = arith.addf %29, %30 : vector<4x32xf32>
    %32 = vector.extract_strided_slice %1 {offsets = [0, 512], sizes = [4, 32], strides = [1, 1]} : vector<4x1024xf32> to vector<4x32xf32>
    %33 = vector.extract_strided_slice %1 {offsets = [0, 544], sizes = [4, 32], strides = [1, 1]} : vector<4x1024xf32> to vector<4x32xf32>
    %34 = arith.addf %32, %33 : vector<4x32xf32>
    %35 = vector.extract_strided_slice %1 {offsets = [0, 576], sizes = [4, 32], strides = [1, 1]} : vector<4x1024xf32> to vector<4x32xf32>
    %36 = arith.addf %34, %35 : vector<4x32xf32>
    %37 = vector.extract_strided_slice %1 {offsets = [0, 608], sizes = [4, 32], strides = [1, 1]} : vector<4x1024xf32> to vector<4x32xf32>
    %38 = arith.addf %36, %37 : vector<4x32xf32>
    %39 = vector.extract_strided_slice %1 {offsets = [0, 640], sizes = [4, 32], strides = [1, 1]} : vector<4x1024xf32> to vector<4x32xf32>
    %40 = arith.addf %38, %39 : vector<4x32xf32>
    %41 = vector.extract_strided_slice %1 {offsets = [0, 672], sizes = [4, 32], strides = [1, 1]} : vector<4x1024xf32> to vector<4x32xf32>
    %42 = arith.addf %40, %41 : vector<4x32xf32>
    %43 = vector.extract_strided_slice %1 {offsets = [0, 704], sizes = [4, 32], strides = [1, 1]} : vector<4x1024xf32> to vector<4x32xf32>
    %44 = arith.addf %42, %43 : vector<4x32xf32>
    %45 = vector.extract_strided_slice %1 {offsets = [0, 736], sizes = [4, 32], strides = [1, 1]} : vector<4x1024xf32> to vector<4x32xf32>
    %46 = arith.addf %44, %45 : vector<4x32xf32>
    %47 = vector.extract_strided_slice %1 {offsets = [0, 768], sizes = [4, 32], strides = [1, 1]} : vector<4x1024xf32> to vector<4x32xf32>
    %48 = vector.extract_strided_slice %1 {offsets = [0, 800], sizes = [4, 32], strides = [1, 1]} : vector<4x1024xf32> to vector<4x32xf32>
    %49 = arith.addf %47, %48 : vector<4x32xf32>
    %50 = vector.extract_strided_slice %1 {offsets = [0, 832], sizes = [4, 32], strides = [1, 1]} : vector<4x1024xf32> to vector<4x32xf32>
    %51 = arith.addf %49, %50 : vector<4x32xf32>
    %52 = vector.extract_strided_slice %1 {offsets = [0, 864], sizes = [4, 32], strides = [1, 1]} : vector<4x1024xf32> to vector<4x32xf32>
    %53 = arith.addf %51, %52 : vector<4x32xf32>
    %54 = vector.extract_strided_slice %1 {offsets = [0, 896], sizes = [4, 32], strides = [1, 1]} : vector<4x1024xf32> to vector<4x32xf32>
    %55 = arith.addf %53, %54 : vector<4x32xf32>
    %56 = vector.extract_strided_slice %1 {offsets = [0, 928], sizes = [4, 32], strides = [1, 1]} : vector<4x1024xf32> to vector<4x32xf32>
    %57 = arith.addf %55, %56 : vector<4x32xf32>
    %58 = vector.extract_strided_slice %1 {offsets = [0, 960], sizes = [4, 32], strides = [1, 1]} : vector<4x1024xf32> to vector<4x32xf32>
    %59 = arith.addf %57, %58 : vector<4x32xf32>
    %60 = vector.extract_strided_slice %1 {offsets = [0, 992], sizes = [4, 32], strides = [1, 1]} : vector<4x1024xf32> to vector<4x32xf32>
    %61 = arith.addf %59, %60 : vector<4x32xf32>
    %62 = tpu.concatenate %16, %31, %46, %61 in 1 : vector<4x32xf32>, vector<4x32xf32>, vector<4x32xf32>, vector<4x32xf32> -> vector<4x128xf32>
    %cst = arith.constant 1.250000e-01 : f32
    %63 = vector.broadcast %cst : f32 to vector<4x128xf32>
    %64 = arith.mulf %62, %63 : vector<4x128xf32>
    %65 = arith.addf %0, %64 : vector<4x128xf32>
    %66 = math.tanh %65 : vector<4x128xf32>
    %c0_3 = arith.constant 0 : index
    %c0_4 = arith.constant 0 : index
    %67 = vector.load %arg3[%c0_3, %c0_4] : memref<4x128xf32, #tpu.memory_space<vmem>>, vector<4x128xf32>
    tpu.vector_store %arg3[%c0_3, %c0_4], %66 {strides = array<i32>} : memref<4x128xf32, #tpu.memory_space<vmem>>, vector<4x128xf32>,
    return
  }
  func.func @transform_0(%arg0: i32) -> (i32, i32) {
    %c0_i32 = arith.constant 0 : i32
    %c0_i32_0 = arith.constant 0 : i32
    return %arg0, %c0_i32 : i32, i32
  }
  func.func @transform_1(%arg0: i32) -> (i32, i32) {
    %c0_i32 = arith.constant 0 : i32
    %c0_i32_0 = arith.constant 0 : i32
    return %arg0, %c0_i32 : i32, i32
  }
  func.func @transform_2(%arg0: i32) -> (i32, i32) {
    %c0_i32 = arith.constant 0 : i32
    %c0_i32_0 = arith.constant 0 : i32
    return %arg0, %c0_i32 : i32, i32
  }
}

</mosaic_0001>

<llo_original>
// kernel: tpu_custom_call.1
$region0: #{tpu_custom_call.1}
  #allocation0 [shape = 'u32[]', space=smem, size = 0x4, offset = 0x4, fixed_abs, tag = 'smem constant byte address 0x4 - core index']
  #allocation1 [shape = 'u32[144,128]{1,0:T(1,128)}', space=vmem, size = 0x12000, scoped, tag = 'internal scratch']
  %s0 = inlined_call_operand.hbm [shape: f32[4,128], index: 0, kind: input, shape index: {}]
  %s1 = inlined_call_operand.hbm [shape: f32[4,1024], index: 1, kind: input, shape index: {}]
  %s2 = inlined_call_operand.hbm [shape: f32[4,128], index: 2, kind: output, shape index: {}]
  %s3 = sld [smem:[#allocation0]]
  $region26: #{tpu_custom_call.1} parent=0
    _
  %s5 = ssub.s32 1, %s3
  %s6 = scalar_select 0, %s5, %s3
  $region1: #{tpu_custom_call.1} parent=0
    #allocation2 [shape = 'u8[2048]{0}', space=vmem, size = 0x800, scoped, tag = 'input window, operand 0, single buffered']
    #allocation3 [shape = 's32[1]{0}', space=sflag, size = 0x4, scoped, tag = 'scoped memory for tpu_custom_call.1']
    #allocation4 [shape = 's32[1]{0}', space=sflag, size = 0x4, scoped, tag = 'scoped memory for tpu_custom_call.1']
    #allocation5 [shape = 'u8[16384]{0}', space=vmem, size = 0x4000, scoped, tag = 'input window, operand 1, single buffered']
    #allocation6 [shape = 's32[1]{0}', space=sflag, size = 0x4, scoped, tag = 'scoped memory for tpu_custom_call.1']
    #allocation7 [shape = 'u8[2048]{0}', space=vmem, size = 0x800, scoped, tag = 'output window, operand 0, single buffered']
    %7 = vsyncpa [#allocation3], 0
    %8 = vsyncpa [#allocation6], 0
    %9 = vsyncpa [#allocation4], 0
    // Predicated region
    $region2: #{tpu_custom_call.1} parent=1 // pred_check
      _
    $region3: #{tpu_custom_call.1} parent=1 // pred_check_branch
      %11 = sbr.rel (0) target = $region5
    $region4: #{tpu_custom_call.1} parent=1 // pred_region
      %s13 = ssub.s32 64, 64
      %14 = vsyncadd [#allocation3], %s13
      %s16 = sshll.u32 [#allocation2], 4
      %s17 = int_to_ptr.vmem [resolvable:$true] %s16
      %19 = dma.hbm_to_vmem [thread:$0]  %s0, 64, %s17, [#allocation3]
    $region5: #{tpu_custom_call.1} parent=1 // pred_fallthru
      _
    // Predicated region
    $region6: #{tpu_custom_call.1} parent=1 // pred_check
      _
    $region7: #{tpu_custom_call.1} parent=1 // pred_check_branch
      %21 = sbr.rel (0) target = $region9
    $region8: #{tpu_custom_call.1} parent=1 // pred_region
      %s23 = ssub.s32 512, 512
      %24 = vsyncadd [#allocation6], %s23
      %s26 = sshll.u32 [#allocation5], 4
      %s27 = int_to_ptr.vmem [resolvable:$true] %s26
      %29 = dma.hbm_to_vmem [thread:$0]  %s1, 512, %s27, [#allocation6]
    $region9: #{tpu_custom_call.1} parent=1 // pred_fallthru
      _
    // Predicated region
    $region10: #{tpu_custom_call.1} parent=1 // pred_check
      _
    $region11: #{tpu_custom_call.1} parent=1 // pred_check_branch
      %31 = sbr.rel (0) target = $region13
    $region12: #{tpu_custom_call.1} parent=1 // pred_region
      %32 = dma.done [#allocation3], 64
    $region13: #{tpu_custom_call.1} parent=1 // pred_fallthru
      _
    // Predicated region
    $region14: #{tpu_custom_call.1} parent=1 // pred_check
      _
    $region15: #{tpu_custom_call.1} parent=1 // pred_check_branch
      %34 = sbr.rel (0) target = $region17
    $region16: #{tpu_custom_call.1} parent=1 // pred_region
      %35 = dma.done [#allocation6], 512
    $region17: #{tpu_custom_call.1} parent=1 // pred_fallthru
      _
    %v36 = vld [vmem:[#allocation2] sm:$0xf]
    %v37 = vld [vmem:[#allocation5] sm:$0xff]
    %v38 = vld [vmem:[#allocation5 + $0x8] sm:$0xff]
    %v39 = vld [vmem:[#allocation5 + $0x10] sm:$0xff]
    %v40 = vld [vmem:[#allocation5 + $0x18] sm:$0xff]
    %42 = vrot.lane.b32.xlu0 %v37, 96
    %v43 = vpop.permute.xlu0 %42
    %v45 = vadd.f32 %v37, %v43
    %46 = vrot.lane.b32.xlu0 %v37, 64
    %v47 = vpop.permute.xlu0 %46
    %v49 = vadd.f32 %v45, %v47
    %50 = vrot.lane.b32.xlu0 %v37, 32
    %v51 = vpop.permute.xlu0 %50
    %v53 = vadd.f32 %v49, %v51
    %v54 = vrot.slane %v37, 4
    %v56 = vadd.f32 %v53, %v54
    %v57 = vrot.slane %v43, 4
    %v59 = vadd.f32 %v56, %v57
    %v60 = vrot.slane %v47, 4
    %v62 = vadd.f32 %v59, %v60
    %v63 = vrot.slane %v51, 4
    %v65 = vadd.f32 %v62, %v63
    %67 = vrot.lane.b32.xlu0 %v38, 96
    %v68 = vpop.permute.xlu0 %67
    %v70 = vadd.f32 %v38, %v68
    %71 = vrot.lane.b32.xlu0 %v38, 64
    %v72 = vpop.permute.xlu0 %71
    %v74 = vadd.f32 %v70, %v72
    %75 = vrot.lane.b32.xlu0 %v38, 32
    %v76 = vpop.permute.xlu0 %75
    %v78 = vadd.f32 %v74, %v76
    %v79 = vrot.slane %v38, 4
    %v81 = vadd.f32 %v78, %v79
    %v82 = vrot.slane %v68, 4
    %v84 = vadd.f32 %v81, %v82
    %v85 = vrot.slane %v72, 4
    %v87 = vadd.f32 %v84, %v85
    %v88 = vrot.slane %v76, 4
    %v90 = vadd.f32 %v87, %v88
    %92 = vrot.lane.b32.xlu0 %v39, 96
    %v93 = vpop.permute.xlu0 %92
    %v95 = vadd.f32 %v39, %v93
    %96 = vrot.lane.b32.xlu0 %v39, 64
    %v97 = vpop.permute.xlu0 %96
    %v99 = vadd.f32 %v95, %v97
    %100 = vrot.lane.b32.xlu0 %v39, 32
    %v101 = vpop.permute.xlu0 %100
    %v103 = vadd.f32 %v99, %v101
    %v104 = vrot.slane %v39, 4
    %v106 = vadd.f32 %v103, %v104
    %v107 = vrot.slane %v93, 4
    %v109 = vadd.f32 %v106, %v107
    %v110 = vrot.slane %v97, 4
    %v112 = vadd.f32 %v109, %v110
    %v113 = vrot.slane %v101, 4
    %v115 = vadd.f32 %v112, %v113
    %117 = vrot.lane.b32.xlu0 %v40, 96
    %v118 = vpop.permute.xlu0 %117
    %v120 = vadd.f32 %v40, %v118
    %121 = vrot.lane.b32.xlu0 %v40, 64
    %v122 = vpop.permute.xlu0 %121
    %v124 = vadd.f32 %v120, %v122
    %125 = vrot.lane.b32.xlu0 %v40, 32
    %v126 = vpop.permute.xlu0 %125
    %v128 = vadd.f32 %v124, %v126
    %v129 = vrot.slane %v40, 4
    %v131 = vadd.f32 %v128, %v129
    %v132 = vrot.slane %v118, 4
    %v134 = vadd.f32 %v131, %v132
    %v135 = vrot.slane %v122, 4
    %v137 = vadd.f32 %v134, %v135
    %v138 = vrot.slane %v126, 4
    %v140 = vadd.f32 %v137, %v138
    %142 = vrot.lane.b32.xlu0 %v90, 32
    %v143 = vpop.permute.xlu0 %142
    %146 = vrot.lane.b32.xlu0 %v115, 64
    %v147 = vpop.permute.xlu0 %146
    %150 = vrot.lane.b32.xlu0 %v140, 96
    %v151 = vpop.permute.xlu0 %150
    %vm153 = vcmask 261120
    %v154 = vsel %vm153, %v65, %v143
    %vm155 = vcmask 523264
    %v156 = vsel %vm155, %v154, %v147
    %vm157 = vcmask 785408
    %v158 = vsel %vm157, %v156, %v151
    %v159 = vmul.f32 %v158, 0.125
    %v160 = vadd.f32 %v36, %v159
    %v161 = vtanh.pop %v160
    %162 = vst [vmem:[#allocation7] sm:$0xf] %v161
    // Predicated region
    $region18: #{tpu_custom_call.1} parent=1 // pred_check
      _
    $region19: #{tpu_custom_call.1} parent=1 // pred_check_branch
      %164 = sbr.rel (0) target = $region21
    $region20: #{tpu_custom_call.1} parent=1 // pred_region
      %s166 = ssub.s32 64, 64
      %167 = vsyncadd [#allocation4], %s166
      %s169 = sshll.u32 [#allocation7], 4
      %s170 = int_to_ptr.vmem [resolvable:$true] %s169
      %172 = dma.vmem_to_hbm [thread:$0]  %s170, 64, %s2, [#allocation4]
    $region21: #{tpu_custom_call.1} parent=1 // pred_fallthru
      _
    // Predicated region
    $region22: #{tpu_custom_call.1} parent=1 // pred_check
      _
    $region23: #{tpu_custom_call.1} parent=1 // pred_check_branch
      %174 = sbr.rel (0) target = $region25
    $region24: #{tpu_custom_call.1} parent=1 // pred_region
      %175 = dma.done [#allocation4], 64
    $region25: #{tpu_custom_call.1} parent=1 // pred_fallthru
      _
    %176 = vsyncpa [#allocation3], 1
    %177 = vsyncpa [#allocation6], 1
    %178 = vsyncpa [#allocation4], 1

</llo_original>
